<compile_context>
chip_gen: v7x
topology: tpu7x:2x2x1
jax: 0.10.0
libtpu: 0.0.40
codegen_flags: <defaults>
</compile_context>

<pallas_src>
import functools
import math

import jax
import jax.numpy as jnp
from jax.experimental import pallas as pl
from jax.experimental.pallas import tpu as pltpu

LANE = 128
SUBLANE = 8


def _round_up(x, m):
    return (x + m - 1) // m * m


def _layer_dims(input_size, output_size):
    return [input_size, 512, 256, 128, 64, 32, output_size]


def _fused_mlp_kernel(x_ref, *refs, num_layers):
    """refs = (w0, b0, ..., w{L-1}, b{L-1}, o_ref, scratch_a, scratch_b).

    Activations ping-pong between the two bf16 VMEM scratch buffers; each layer
    is a bf16 matmul (f32 accumulate) + f32 bias + ReLU, re-cast to bf16 before
    being written back to scratch.  Padded weight rows/cols are zero, so every
    read of a padded column contributes exactly 0.
    """
    wb = refs[: 2 * num_layers]
    o_ref = refs[2 * num_layers]
    scratch = (refs[2 * num_layers + 1], refs[2 * num_layers + 2])

    h_in_ref = x_ref  # bf16 (bt, fin0)
    for i in range(num_layers):
        w_ref = wb[2 * i]
        b_ref = wb[2 * i + 1]
        fin, fout = w_ref.shape
        x = h_in_ref[:, :fin]  # already bf16 (input + scratch are bf16)
        y = jnp.dot(x, w_ref[...], preferred_element_type=jnp.float32)
        y = y + b_ref[...]  # (1, fout) f32 bias broadcasts over batch rows
        if i < num_layers - 1:
            y = jnp.maximum(y, 0.0).astype(jnp.bfloat16)
            dst = scratch[i % 2]
            dst[:, :fout] = y
            h_in_ref = dst
        else:
            o_ref[...] = y.astype(o_ref.dtype)  # lane-dense bf16 store (128 lanes)


def _pick_batch_tiling(B, batch_tile):
    """Pick (bt, B_pad) with bt % 8 == 0, B_pad = n_tiles * bt, padding < bt."""
    B8 = _round_up(max(B, 1), SUBLANE)
    target = max(_round_up(batch_tile, SUBLANE), SUBLANE)
    n_tiles = -(-B8 // target)
    # v7x megacore: if the batch can fill the MXU M dim (128 rows) on each of
    # the 2 TensorCores, guarantee at least 2 parallel grid tiles.
    if n_tiles == 1 and B8 >= 2 * 128:
        n_tiles = 2
    bt = _round_up(-(-B8 // n_tiles), SUBLANE)
    return bt, n_tiles * bt


@functools.partial(jax.jit, static_argnames=("output_size", "batch_tile"))
def crop_model_forward(x, params, *, output_size, batch_tile=256):
    """Fused forward pass.

    params: list of (w_bf16 (Fin[_pad], Fout_pad), b_f32 (1, Fout_pad)).
    Layer-0 Fin is unpadded; all other feature dims are padded to 128 lanes.
    """
    B, Fin = x.shape
    num_layers = len(params)
    in_dim = params[0][0].shape[0]  # unpadded layer-0 K (== Fin)
    out_pad = params[-1][0].shape[1]  # lane-padded output width (>=128)
    hidden_max = max(w.shape[1] for w, _ in params[:-1]) if num_layers > 1 else out_pad

    bt, B_pad = _pick_batch_tiling(B, batch_tile)

    # bf16 input stream; pad rows only (layer-0 K stays at its real width).
    x_pad = (
        jnp.zeros((B_pad, in_dim), jnp.bfloat16)
        .at[:B, :Fin]
        .set(x.astype(jnp.bfloat16))
    )

    flat_params = []
    in_specs = [pl.BlockSpec((bt, in_dim), lambda i: (i, 0))]
    for w, b in params:
        flat_params += [w, b]
        # Full-array blocks with constant index_map -> weights/biases loaded
        # into VMEM once and kept resident across all batch-tile grid steps.
        in_specs.append(pl.BlockSpec(w.shape, lambda i: (0, 0)))
        in_specs.append(pl.BlockSpec(b.shape, lambda i: (0, 0)))

    flops = 2 * B_pad * sum(w.shape[0] * w.shape[1] for w, _ in params)
    bytes_accessed = (
        B_pad * in_dim * 2  # bf16 input stream
        + B_pad * out_pad * 2  # bf16 output writeback
        + sum(w.size * w.dtype.itemsize + b.size * b.dtype.itemsize for w, b in params)
    )

    kernel = functools.partial(_fused_mlp_kernel, num_layers=num_layers)
    out = pl.pallas_call(
        kernel,
        out_shape=jax.ShapeDtypeStruct((B_pad, out_pad), jnp.bfloat16),
        grid_spec=pltpu.PrefetchScalarGridSpec(
            num_scalar_prefetch=0,
            grid=(B_pad // bt,),
            in_specs=in_specs,
            out_specs=pl.BlockSpec((bt, out_pad), lambda i: (i, 0)),
            scratch_shapes=[
                pltpu.VMEM((bt, hidden_max), jnp.bfloat16),
                pltpu.VMEM((bt, hidden_max), jnp.bfloat16),
            ],
        ),
        compiler_params=pltpu.CompilerParams(
            dimension_semantics=("parallel",),  # batch tiles independent -> 2 TCs on v7x
        ),
        cost_estimate=pl.CostEstimate(
            flops=flops, transcendentals=0, bytes_accessed=bytes_accessed
        ),
    )(x_pad, *flat_params)

    return out[:B, :output_size].astype(jnp.float32)


def init_crop_model_params(input_size, output_size, key):
    """nn.Linear-style init U(-1/sqrt(fan_in), 1/sqrt(fan_in)).

    Returns (padded_params, raw_params):
      padded_params: weights bf16 (Fin[_pad], Fout_pad), biases f32 (1, Fout_pad);
                     every feature dim is lane-padded to 128 EXCEPT the raw
                     input dim (layer-0 K), which stays at input_size.
      raw_params:    unpadded f32 (Fin, Fout) / (Fout,) for the reference check.
    """
    dims = _layer_dims(input_size, output_size)
    padded = [dims[0]] + [_round_up(d, LANE) for d in dims[1:]]
    padded_params, raw_params = [], []
    for i in range(len(dims) - 1):
        fan_in, fan_out = dims[i], dims[i + 1]
        key, kw, kb = jax.random.split(key, 3)
        bound = 1.0 / math.sqrt(fan_in)
        w = jax.random.uniform(kw, (fan_in, fan_out), jnp.float32, -bound, bound)
        b = jax.random.uniform(kb, (fan_out,), jnp.float32, -bound, bound)
        raw_params.append((w, b))

        fin_p, fout_p = padded[i], padded[i + 1]
        w_p = (
            jnp.zeros((fin_p, fout_p), jnp.float32)
            .at[:fan_in, :fan_out]
            .set(w)
            .astype(jnp.bfloat16)
        )
        b_p = jnp.zeros((1, fout_p), jnp.float32).at[0, :fan_out].set(b)
        padded_params.append((w_p, b_p))
    return padded_params, raw_params


def crop_model_reference(x, raw_params):
    """Pure-JAX reference with identical bf16-matmul / f32-accumulate arithmetic."""
    n = len(raw_params)
    h = x
    for i, (w, b) in enumerate(raw_params):
        h = jnp.dot(
            h.astype(jnp.bfloat16),
            w.astype(jnp.bfloat16),
            preferred_element_type=jnp.float32,
        ) + b
        if i < n - 1:
            h = jnp.maximum(h, 0.0)
    return h


if __name__ == "__main__":
    input_size = 32
    output_size = 8
    batch = 8

    key = jax.random.PRNGKey(0)
    key, kx = jax.random.split(key)
    x = jax.random.normal(kx, (batch, input_size), dtype=jnp.float32)

    params, raw_params = init_crop_model_params(input_size, output_size, key)

    out = crop_model_forward(x, params, output_size=output_size)
    out = jax.block_until_ready(out)

    ref = crop_model_reference(x, raw_params)
    # Kernel stores the final layer as bf16; quantize the reference the same way.
    ref_q = ref.astype(jnp.bfloat16).astype(jnp.float32)

    assert out.shape == (batch, output_size)
    assert jnp.allclose(out, ref_q, atol=1e-2, rtol=1e-2), (
        "Pallas output mismatch vs reference"
    )

    print("KERNEL_OK")
</pallas_src>

<mosaic_0001>
module attributes {stable_mosaic.version = 11 : i64} {
  func.func @_fused_mlp_kernel(%arg0: i32, %arg1: memref<8x32xbf16, #tpu.memory_space<vmem>>, %arg2: memref<32x512xbf16, #tpu.memory_space<vmem>>, %arg3: memref<1x512xf32, #tpu.memory_space<vmem>>, %arg4: memref<512x256xbf16, #tpu.memory_space<vmem>>, %arg5: memref<1x256xf32, #tpu.memory_space<vmem>>, %arg6: memref<256x128xbf16, #tpu.memory_space<vmem>>, %arg7: memref<1x128xf32, #tpu.memory_space<vmem>>, %arg8: memref<128x128xbf16, #tpu.memory_space<vmem>>, %arg9: memref<1x128xf32, #tpu.memory_space<vmem>>, %arg10: memref<128x128xbf16, #tpu.memory_space<vmem>>, %arg11: memref<1x128xf32, #tpu.memory_space<vmem>>, %arg12: memref<128x128xbf16, #tpu.memory_space<vmem>>, %arg13: memref<1x128xf32, #tpu.memory_space<vmem>>, %arg14: memref<8x128xbf16, #tpu.memory_space<vmem>>, %arg15: memref<8x512xbf16, #tpu.memory_space<vmem>>, %arg16: memref<8x512xbf16, #tpu.memory_space<vmem>>) attributes {dimension_semantics = [#tpu.dimension_semantics<parallel>], iteration_bounds = array<i64: 1>, scalar_prefetch = 0 : i64, scratch_operands = 2 : i64, tpu.core_type = #tpu.core_type<tc>, window_params = [{transform_indices = @transform_0, window_bounds = array<i64: 8, 32>}, {pipeline_mode = #tpu.pipeline_mode<synchronous>, transform_indices = @transform_1, window_bounds = array<i64: 32, 512>}, {pipeline_mode = #tpu.pipeline_mode<synchronous>, transform_indices = @transform_2, window_bounds = array<i64: 1, 512>}, {pipeline_mode = #tpu.pipeline_mode<synchronous>, transform_indices = @transform_3, window_bounds = array<i64: 512, 256>}, {pipeline_mode = #tpu.pipeline_mode<synchronous>, transform_indices = @transform_4, window_bounds = array<i64: 1, 256>}, {pipeline_mode = #tpu.pipeline_mode<synchronous>, transform_indices = @transform_5, window_bounds = array<i64: 256, 128>}, {pipeline_mode = #tpu.pipeline_mode<synchronous>, transform_indices = @transform_6, window_bounds = array<i64: 1, 128>}, {pipeline_mode = #tpu.pipeline_mode<synchronous>, transform_indices = @transform_7, window_bounds = array<i64: 128, 128>}, {pipeline_mode = #tpu.pipeline_mode<synchronous>, transform_indices = @transform_8, window_bounds = array<i64: 1, 128>}, {pipeline_mode = #tpu.pipeline_mode<synchronous>, transform_indices = @transform_9, window_bounds = array<i64: 128, 128>}, {pipeline_mode = #tpu.pipeline_mode<synchronous>, transform_indices = @transform_10, window_bounds = array<i64: 1, 128>}, {pipeline_mode = #tpu.pipeline_mode<synchronous>, transform_indices = @transform_11, window_bounds = array<i64: 128, 128>}, {pipeline_mode = #tpu.pipeline_mode<synchronous>, transform_indices = @transform_12, window_bounds = array<i64: 1, 128>}, {transform_indices = @transform_13, window_bounds = array<i64: 8, 128>}]} {
    %c0 = arith.constant 0 : index
    %c0_0 = arith.constant 0 : index
    %0 = vector.load %arg1[%c0, %c0_0] : memref<8x32xbf16, #tpu.memory_space<vmem>>, vector<8x32xbf16>
    %c0_1 = arith.constant 0 : index
    %c0_2 = arith.constant 0 : index
    %1 = vector.load %arg2[%c0_1, %c0_2] : memref<32x512xbf16, #tpu.memory_space<vmem>>, vector<32x512xbf16>
    %cst = arith.constant dense<0.000000e+00> : vector<8x512xf32>
    %2 = tpu.matmul %0, %1, %cst {dimension_numbers = #tpu.dot_dimension_numbers<[1], [0], [0], [1], [0, 0, 1, 1], [], []>} : vector<8x32xbf16>, vector<32x512xbf16>, vector<8x512xf32> -> vector<8x512xf32>
    %c0_3 = arith.constant 0 : index
    %c0_4 = arith.constant 0 : index
    %3 = vector.load %arg3[%c0_3, %c0_4] : memref<1x512xf32, #tpu.memory_space<vmem>>, vector<1x512xf32>
    %4 = vector.broadcast %3 : vector<1x512xf32> to vector<8x512xf32>
    %5 = arith.addf %2, %4 : vector<8x512xf32>
    %cst_5 = arith.constant 0.000000e+00 : f32
    %6 = vector.broadcast %cst_5 : f32 to vector<8x512xf32>
    %7 = arith.maximumf %5, %6 : vector<8x512xf32>
    %8 = arith.truncf %7 : vector<8x512xf32> to vector<8x512xbf16>
    %c0_6 = arith.constant 0 : index
    %c0_7 = arith.constant 0 : index
    %9 = vector.load %arg15[%c0_6, %c0_7] : memref<8x512xbf16, #tpu.memory_space<vmem>>, vector<8x512xbf16>
    tpu.vector_store %arg15[%c0_6, %c0_7], %8 {strides = array<i32>} : memref<8x512xbf16, #tpu.memory_space<vmem>>, vector<8x512xbf16>,
    %c0_8 = arith.constant 0 : index
    %c0_9 = arith.constant 0 : index
    %10 = vector.load %arg15[%c0_8, %c0_9] : memref<8x512xbf16, #tpu.memory_space<vmem>>, vector<8x512xbf16>
    %c0_10 = arith.constant 0 : index
    %c0_11 = arith.constant 0 : index
    %11 = vector.load %arg4[%c0_10, %c0_11] : memref<512x256xbf16, #tpu.memory_space<vmem>>, vector<512x256xbf16>
    %cst_12 = arith.constant dense<0.000000e+00> : vector<8x256xf32>
    %12 = tpu.matmul %10, %11, %cst_12 {dimension_numbers = #tpu.dot_dimension_numbers<[1], [0], [0], [1], [0, 0, 1, 1], [], []>} : vector<8x512xbf16>, vector<512x256xbf16>, vector<8x256xf32> -> vector<8x256xf32>
    %c0_13 = arith.constant 0 : index
    %c0_14 = arith.constant 0 : index
    %13 = vector.load %arg5[%c0_13, %c0_14] : memref<1x256xf32, #tpu.memory_space<vmem>>, vector<1x256xf32>
    %14 = vector.broadcast %13 : vector<1x256xf32> to vector<8x256xf32>
    %15 = arith.addf %12, %14 : vector<8x256xf32>
    %cst_15 = arith.constant 0.000000e+00 : f32
    %16 = vector.broadcast %cst_15 : f32 to vector<8x256xf32>
    %17 = arith.maximumf %15, %16 : vector<8x256xf32>
    %18 = arith.truncf %17 : vector<8x256xf32> to vector<8x256xbf16>
    %c0_16 = arith.constant 0 : index
    %c0_17 = arith.constant 0 : index
    %19 = vector.load %arg16[%c0_16, %c0_17] : memref<8x512xbf16, #tpu.memory_space<vmem>>, vector<8x256xbf16>
    tpu.vector_store %arg16[%c0_16, %c0_17], %18 {strides = array<i32>} : memref<8x512xbf16, #tpu.memory_space<vmem>>, vector<8x256xbf16>,
    %c0_18 = arith.constant 0 : index
    %c0_19 = arith.constant 0 : index
    %20 = vector.load %arg16[%c0_18, %c0_19] : memref<8x512xbf16, #tpu.memory_space<vmem>>, vector<8x256xbf16>
    %c0_20 = arith.constant 0 : index
    %c0_21 = arith.constant 0 : index
    %21 = vector.load %arg6[%c0_20, %c0_21] : memref<256x128xbf16, #tpu.memory_space<vmem>>, vector<256x128xbf16>
    %cst_22 = arith.constant dense<0.000000e+00> : vector<8x128xf32>
    %22 = tpu.matmul %20, %21, %cst_22 {dimension_numbers = #tpu.dot_dimension_numbers<[1], [0], [0], [1], [0, 0, 1, 1], [], []>} : vector<8x256xbf16>, vector<256x128xbf16>, vector<8x128xf32> -> vector<8x128xf32>
    %c0_23 = arith.constant 0 : index
    %c0_24 = arith.constant 0 : index
    %23 = vector.load %arg7[%c0_23, %c0_24] : memref<1x128xf32, #tpu.memory_space<vmem>>, vector<1x128xf32>
    %24 = vector.broadcast %23 : vector<1x128xf32> to vector<8x128xf32>
    %25 = arith.addf %22, %24 : vector<8x128xf32>
    %cst_25 = arith.constant 0.000000e+00 : f32
    %26 = vector.broadcast %cst_25 : f32 to vector<8x128xf32>
    %27 = arith.maximumf %25, %26 : vector<8x128xf32>
    %28 = arith.truncf %27 : vector<8x128xf32> to vector<8x128xbf16>
    %c0_26 = arith.constant 0 : index
    %c0_27 = arith.constant 0 : index
    %29 = vector.load %arg15[%c0_26, %c0_27] : memref<8x512xbf16, #tpu.memory_space<vmem>>, vector<8x128xbf16>
    tpu.vector_store %arg15[%c0_26, %c0_27], %28 {strides = array<i32>} : memref<8x512xbf16, #tpu.memory_space<vmem>>, vector<8x128xbf16>,
    %c0_28 = arith.constant 0 : index
    %c0_29 = arith.constant 0 : index
    %30 = vector.load %arg15[%c0_28, %c0_29] : memref<8x512xbf16, #tpu.memory_space<vmem>>, vector<8x128xbf16>
    %c0_30 = arith.constant 0 : index
    %c0_31 = arith.constant 0 : index
    %31 = vector.load %arg8[%c0_30, %c0_31] : memref<128x128xbf16, #tpu.memory_space<vmem>>, vector<128x128xbf16>
    %cst_32 = arith.constant dense<0.000000e+00> : vector<8x128xf32>
    %32 = tpu.matmul %30, %31, %cst_32 {dimension_numbers = #tpu.dot_dimension_numbers<[1], [0], [0], [1], [0, 0, 1, 1], [], []>} : vector<8x128xbf16>, vector<128x128xbf16>, vector<8x128xf32> -> vector<8x128xf32>
    %c0_33 = arith.constant 0 : index
    %c0_34 = arith.constant 0 : index
    %33 = vector.load %arg9[%c0_33, %c0_34] : memref<1x128xf32, #tpu.memory_space<vmem>>, vector<1x128xf32>
    %34 = vector.broadcast %33 : vector<1x128xf32> to vector<8x128xf32>
    %35 = arith.addf %32, %34 : vector<8x128xf32>
    %cst_35 = arith.constant 0.000000e+00 : f32
    %36 = vector.broadcast %cst_35 : f32 to vector<8x128xf32>
    %37 = arith.maximumf %35, %36 : vector<8x128xf32>
    %38 = arith.truncf %37 : vector<8x128xf32> to vector<8x128xbf16>
    %c0_36 = arith.constant 0 : index
    %c0_37 = arith.constant 0 : index
    %39 = vector.load %arg16[%c0_36, %c0_37] : memref<8x512xbf16, #tpu.memory_space<vmem>>, vector<8x128xbf16>
    tpu.vector_store %arg16[%c0_36, %c0_37], %38 {strides = array<i32>} : memref<8x512xbf16, #tpu.memory_space<vmem>>, vector<8x128xbf16>,
    %c0_38 = arith.constant 0 : index
    %c0_39 = arith.constant 0 : index
    %40 = vector.load %arg16[%c0_38, %c0_39] : memref<8x512xbf16, #tpu.memory_space<vmem>>, vector<8x128xbf16>
    %c0_40 = arith.constant 0 : index
    %c0_41 = arith.constant 0 : index
    %41 = vector.load %arg10[%c0_40, %c0_41] : memref<128x128xbf16, #tpu.memory_space<vmem>>, vector<128x128xbf16>
    %cst_42 = arith.constant dense<0.000000e+00> : vector<8x128xf32>
    %42 = tpu.matmul %40, %41, %cst_42 {dimension_numbers = #tpu.dot_dimension_numbers<[1], [0], [0], [1], [0, 0, 1, 1], [], []>} : vector<8x128xbf16>, vector<128x128xbf16>, vector<8x128xf32> -> vector<8x128xf32>
    %c0_43 = arith.constant 0 : index
    %c0_44 = arith.constant 0 : index
    %43 = vector.load %arg11[%c0_43, %c0_44] : memref<1x128xf32, #tpu.memory_space<vmem>>, vector<1x128xf32>
    %44 = vector.broadcast %43 : vector<1x128xf32> to vector<8x128xf32>
    %45 = arith.addf %42, %44 : vector<8x128xf32>
    %cst_45 = arith.constant 0.000000e+00 : f32
    %46 = vector.broadcast %cst_45 : f32 to vector<8x128xf32>
    %47 = arith.maximumf %45, %46 : vector<8x128xf32>
    %48 = arith.truncf %47 : vector<8x128xf32> to vector<8x128xbf16>
    %c0_46 = arith.constant 0 : index
    %c0_47 = arith.constant 0 : index
    %49 = vector.load %arg15[%c0_46, %c0_47] : memref<8x512xbf16, #tpu.memory_space<vmem>>, vector<8x128xbf16>
    tpu.vector_store %arg15[%c0_46, %c0_47], %48 {strides = array<i32>} : memref<8x512xbf16, #tpu.memory_space<vmem>>, vector<8x128xbf16>,
    %c0_48 = arith.constant 0 : index
    %c0_49 = arith.constant 0 : index
    %50 = vector.load %arg15[%c0_48, %c0_49] : memref<8x512xbf16, #tpu.memory_space<vmem>>, vector<8x128xbf16>
    %c0_50 = arith.constant 0 : index
    %c0_51 = arith.constant 0 : index
    %51 = vector.load %arg12[%c0_50, %c0_51] : memref<128x128xbf16, #tpu.memory_space<vmem>>, vector<128x128xbf16>
    %cst_52 = arith.constant dense<0.000000e+00> : vector<8x128xf32>
    %52 = tpu.matmul %50, %51, %cst_52 {dimension_numbers = #tpu.dot_dimension_numbers<[1], [0], [0], [1], [0, 0, 1, 1], [], []>} : vector<8x128xbf16>, vector<128x128xbf16>, vector<8x128xf32> -> vector<8x128xf32>
    %c0_53 = arith.constant 0 : index
    %c0_54 = arith.constant 0 : index
    %53 = vector.load %arg13[%c0_53, %c0_54] : memref<1x128xf32, #tpu.memory_space<vmem>>, vector<1x128xf32>
    %54 = vector.broadcast %53 : vector<1x128xf32> to vector<8x128xf32>
    %55 = arith.addf %52, %54 : vector<8x128xf32>
    %56 = arith.truncf %55 : vector<8x128xf32> to vector<8x128xbf16>
    %c0_55 = arith.constant 0 : index
    %c0_56 = arith.constant 0 : index
    %57 = vector.load %arg14[%c0_55, %c0_56] : memref<8x128xbf16, #tpu.memory_space<vmem>>, vector<8x128xbf16>
    tpu.vector_store %arg14[%c0_55, %c0_56], %56 {strides = array<i32>} : memref<8x128xbf16, #tpu.memory_space<vmem>>, vector<8x128xbf16>,
    return
  }
  func.func @transform_0(%arg0: i32) -> (i32, i32) {
    %c0_i32 = arith.constant 0 : i32
    %c0_i32_0 = arith.constant 0 : i32
    return %arg0, %c0_i32 : i32, i32
  }
  func.func @transform_1(%arg0: i32) -> (i32, i32) {
    %c0_i32 = arith.constant 0 : i32
    %c0_i32_0 = arith.constant 0 : i32
    %c0_i32_1 = arith.constant 0 : i32
    return %c0_i32, %c0_i32_0 : i32, i32
  }
  func.func @transform_2(%arg0: i32) -> (i32, i32) {
    %c0_i32 = arith.constant 0 : i32
    %c0_i32_0 = arith.constant 0 : i32
    %c0_i32_1 = arith.constant 0 : i32
    return %c0_i32, %c0_i32_0 : i32, i32
  }
  func.func @transform_3(%arg0: i32) -> (i32, i32) {
    %c0_i32 = arith.constant 0 : i32
    %c0_i32_0 = arith.constant 0 : i32
    %c0_i32_1 = arith.constant 0 : i32
    return %c0_i32, %c0_i32_0 : i32, i32
  }
  func.func @transform_4(%arg0: i32) -> (i32, i32) {
    %c0_i32 = arith.constant 0 : i32
    %c0_i32_0 = arith.constant 0 : i32
    %c0_i32_1 = arith.constant 0 : i32
    return %c0_i32, %c0_i32_0 : i32, i32
  }
  func.func @transform_5(%arg0: i32) -> (i32, i32) {
    %c0_i32 = arith.constant 0 : i32
    %c0_i32_0 = arith.constant 0 : i32
    %c0_i32_1 = arith.constant 0 : i32
    return %c0_i32, %c0_i32_0 : i32, i32
  }
  func.func @transform_6(%arg0: i32) -> (i32, i32) {
    %c0_i32 = arith.constant 0 : i32
    %c0_i32_0 = arith.constant 0 : i32
    %c0_i32_1 = arith.constant 0 : i32
    return %c0_i32, %c0_i32_0 : i32, i32
  }
  func.func @transform_7(%arg0: i32) -> (i32, i32) {
    %c0_i32 = arith.constant 0 : i32
    %c0_i32_0 = arith.constant 0 : i32
    %c0_i32_1 = arith.constant 0 : i32
    return %c0_i32, %c0_i32_0 : i32, i32
  }
  func.func @transform_8(%arg0: i32) -> (i32, i32) {
    %c0_i32 = arith.constant 0 : i32
    %c0_i32_0 = arith.constant 0 : i32
    %c0_i32_1 = arith.constant 0 : i32
    return %c0_i32, %c0_i32_0 : i32, i32
  }
  func.func @transform_9(%arg0: i32) -> (i32, i32) {
    %c0_i32 = arith.constant 0 : i32
    %c0_i32_0 = arith.constant 0 : i32
    %c0_i32_1 = arith.constant 0 : i32
    return %c0_i32, %c0_i32_0 : i32, i32
  }
  func.func @transform_10(%arg0: i32) -> (i32, i32) {
    %c0_i32 = arith.constant 0 : i32
    %c0_i32_0 = arith.constant 0 : i32
    %c0_i32_1 = arith.constant 0 : i32
    return %c0_i32, %c0_i32_0 : i32, i32
  }
  func.func @transform_11(%arg0: i32) -> (i32, i32) {
    %c0_i32 = arith.constant 0 : i32
    %c0_i32_0 = arith.constant 0 : i32
    %c0_i32_1 = arith.constant 0 : i32
    return %c0_i32, %c0_i32_0 : i32, i32
  }
  func.func @transform_12(%arg0: i32) -> (i32, i32) {
    %c0_i32 = arith.constant 0 : i32
    %c0_i32_0 = arith.constant 0 : i32
    %c0_i32_1 = arith.constant 0 : i32
    return %c0_i32, %c0_i32_0 : i32, i32
  }
  func.func @transform_13(%arg0: i32) -> (i32, i32) {
    %c0_i32 = arith.constant 0 : i32
    %c0_i32_0 = arith.constant 0 : i32
    return %arg0, %c0_i32 : i32, i32
  }
}

</mosaic_0001>

<llo_original>
// kernel: crop_model_forward.1
$region0: #{crop_model_forward.1}
  #allocation0 [shape = 'u32[]', space=smem, size = 0x4, offset = 0x4, fixed_abs, tag = 'smem constant byte address 0x4 - core index']
  #allocation1 [shape = 'u32[144,128]{1,0:T(1,128)}', space=vmem, size = 0x12000, scoped, tag = 'internal scratch']
  #allocation2 [shape = 'bf16[8,512]{1,0:T(8,128)(2,1)}', space=vmem, size = 0x2000, scoped, tag = 'scratch operand']
  #allocation3 [shape = 'bf16[8,512]{1,0:T(8,128)(2,1)}', space=vmem, size = 0x2000, scoped, tag = 'scratch operand']
  %s0 = inlined_call_operand.vmem [shape: bf16[8,32], index: 0, kind: input, shape index: {}]
  %s1 = inlined_call_operand.hbm [shape: bf16[32,512], index: 1, kind: input, shape index: {}]
  %s2 = inlined_call_operand.vmem [shape: f32[1,512], index: 2, kind: input, shape index: {}]
  %s3 = inlined_call_operand.hbm [shape: bf16[512,256], index: 3, kind: input, shape index: {}]
  %s4 = inlined_call_operand.vmem [shape: f32[1,256], index: 4, kind: input, shape index: {}]
  %s5 = inlined_call_operand.hbm [shape: bf16[256,128], index: 5, kind: input, shape index: {}]
  %s6 = inlined_call_operand.vmem [shape: f32[1,128], index: 6, kind: input, shape index: {}]
  %s7 = inlined_call_operand.hbm [shape: bf16[128,128], index: 7, kind: input, shape index: {}]
  %s8 = inlined_call_operand.vmem [shape: f32[1,128], index: 8, kind: input, shape index: {}]
  %s9 = inlined_call_operand.hbm [shape: bf16[128,128], index: 9, kind: input, shape index: {}]
  %s10 = inlined_call_operand.vmem [shape: f32[1,128], index: 10, kind: input, shape index: {}]
  %s11 = inlined_call_operand.hbm [shape: bf16[128,128], index: 11, kind: input, shape index: {}]
  %s12 = inlined_call_operand.vmem [shape: f32[1,128], index: 12, kind: input, shape index: {}]
  %s13 = inlined_call_operand.vmem [shape: bf16[8,128], index: 13, kind: output, shape index: {}]
  %s14 = sld [smem:[#allocation0]]
  $region86: #{crop_model_forward.1} parent=0
    _
  %s16 = ssub.s32 1, %s14
  %s17 = scalar_select 0, %s16, %s14
  $region1: #{crop_model_forward.1} parent=0
    #allocation4 [shape = 'u8[32768]{0}', space=vmem, size = 0x8000, scoped, tag = 'input window, operand 1, single buffered']
    #allocation5 [shape = 's32[1]{0}', space=sflag, size = 0x4, scoped, tag = 'scoped memory for crop_model_forward.1']
    #allocation6 [shape = 'u8[262144]{0}', space=vmem, size = 0x40000, scoped, tag = 'input window, operand 3, single buffered']
    #allocation7 [shape = 's32[1]{0}', space=sflag, size = 0x4, scoped, tag = 'scoped memory for crop_model_forward.1']
    #allocation8 [shape = 'u8[65536]{0}', space=vmem, size = 0x10000, scoped, tag = 'input window, operand 5, single buffered']
    #allocation9 [shape = 'u8[32768]{0}', space=vmem, size = 0x8000, scoped, tag = 'input window, operand 7, single buffered']
    #allocation10 [shape = 's32[1]{0}', space=sflag, size = 0x4, scoped, tag = 'scoped memory for crop_model_forward.1']
    #allocation11 [shape = 'u8[32768]{0}', space=vmem, size = 0x8000, scoped, tag = 'input window, operand 9, single buffered']
    #allocation12 [shape = 'u8[32768]{0}', space=vmem, size = 0x8000, scoped, tag = 'input window, operand 11, single buffered']
    #allocation13 [shape = 's32[1]{0}', space=sflag, size = 0x4, scoped, tag = 'scoped memory for crop_model_forward.1']
    %18 = vsyncpa [#allocation5], 0
    %19 = vsyncpa [#allocation7], 0
    %20 = vsyncpa [#allocation10], 0
    %21 = vsyncpa [#allocation13], 0
    // Predicated region
    $region2: #{crop_model_forward.1} parent=1 // pred_check
      _
    $region3: #{crop_model_forward.1} parent=1 // pred_check_branch
      %23 = sbr.rel (0) target = $region5
    $region4: #{crop_model_forward.1} parent=1 // pred_region
      _
    $region5: #{crop_model_forward.1} parent=1 // pred_fallthru
      _
    // Predicated region
    $region6: #{crop_model_forward.1} parent=1 // pred_check
      _
    $region7: #{crop_model_forward.1} parent=1 // pred_check_branch
      %25 = sbr.rel (0) target = $region9
    $region8: #{crop_model_forward.1} parent=1 // pred_region
      %s27 = ssub.s32 1024, 1024
      %28 = vsyncadd [#allocation5], %s27
      %s29 = sshll.u32 [#allocation4], 4
      %s30 = int_to_ptr.vmem [resolvable:$true] %s29
      %35 = dma.hbm_to_vmem [thread:$0]  %s1, 1024, %s30, [#allocation5], 256, 256, 16
    $region9: #{crop_model_forward.1} parent=1 // pred_fallthru
      _
    // Predicated region
    $region10: #{crop_model_forward.1} parent=1 // pred_check
      _
    $region11: #{crop_model_forward.1} parent=1 // pred_check_branch
      %37 = sbr.rel (0) target = $region13
    $region12: #{crop_model_forward.1} parent=1 // pred_region
      _
    $region13: #{crop_model_forward.1} parent=1 // pred_fallthru
      _
    // Predicated region
    $region14: #{crop_model_forward.1} parent=1 // pred_check
      _
    $region15: #{crop_model_forward.1} parent=1 // pred_check_branch
      %39 = sbr.rel (0) target = $region17
    $region16: #{crop_model_forward.1} parent=1 // pred_region
      %s41 = ssub.s32 8192, 8192
      %42 = vsyncadd [#allocation7], %s41
      %s43 = sshll.u32 [#allocation6], 4
      %s44 = int_to_ptr.vmem [resolvable:$true] %s43
      %49 = dma.hbm_to_vmem [thread:$0]  %s3, 8192, %s44, [#allocation7], 128, 128, 8
    $region17: #{crop_model_forward.1} parent=1 // pred_fallthru
      _
    // Predicated region
    $region18: #{crop_model_forward.1} parent=1 // pred_check
      _
    $region19: #{crop_model_forward.1} parent=1 // pred_check_branch
      %51 = sbr.rel (0) target = $region21
    $region20: #{crop_model_forward.1} parent=1 // pred_region
      _
    $region21: #{crop_model_forward.1} parent=1 // pred_fallthru
      _
    // Predicated region
    $region22: #{crop_model_forward.1} parent=1 // pred_check
      _
    $region23: #{crop_model_forward.1} parent=1 // pred_check_branch
      %53 = sbr.rel (0) target = $region25
    $region24: #{crop_model_forward.1} parent=1 // pred_region
      %s55 = ssub.s32 2048, 2048
      %56 = vsyncadd [#allocation7], %s55
      %s57 = sshll.u32 [#allocation8], 4
      %s58 = int_to_ptr.vmem [resolvable:$true] %s57
      %63 = dma.hbm_to_vmem [thread:$0]  %s5, 2048, %s58, [#allocation7], 64, 64, 4
    $region25: #{crop_model_forward.1} parent=1 // pred_fallthru
      _
    // Predicated region
    $region26: #{crop_model_forward.1} parent=1 // pred_check
      _
    $region27: #{crop_model_forward.1} parent=1 // pred_check_branch
      %65 = sbr.rel (0) target = $region29
    $region28: #{crop_model_forward.1} parent=1 // pred_region
      _
    $region29: #{crop_model_forward.1} parent=1 // pred_fallthru
      _
    // Predicated region
    $region30: #{crop_model_forward.1} parent=1 // pred_check
      _
    $region31: #{crop_model_forward.1} parent=1 // pred_check_branch
      %67 = sbr.rel (0) target = $region33
    $region32: #{crop_model_forward.1} parent=1 // pred_region
      %s69 = ssub.s32 1024, 1024
      %70 = vsyncadd [#allocation10], %s69
      %s71 = sshll.u32 [#allocation9], 4
      %s72 = int_to_ptr.vmem [resolvable:$true] %s71
      %77 = dma.hbm_to_vmem [thread:$0]  %s7, 1024, %s72, [#allocation10], 64, 64, 4
    $region33: #{crop_model_forward.1} parent=1 // pred_fallthru
      _
    // Predicated region
    $region34: #{crop_model_forward.1} parent=1 // pred_check
      _
    $region35: #{crop_model_forward.1} parent=1 // pred_check_branch
      %79 = sbr.rel (0) target = $region37
    $region36: #{crop_model_forward.1} parent=1 // pred_region
      _
    $region37: #{crop_model_forward.1} parent=1 // pred_fallthru
      _
    // Predicated region
    $region38: #{crop_model_forward.1} parent=1 // pred_check
      _
    $region39: #{crop_model_forward.1} parent=1 // pred_check_branch
      %81 = sbr.rel (0) target = $region41
    $region40: #{crop_model_forward.1} parent=1 // pred_region
      %s83 = ssub.s32 1024, 1024
      %84 = vsyncadd [#allocation10], %s83
      %s85 = sshll.u32 [#allocation11], 4
      %s86 = int_to_ptr.vmem [resolvable:$true] %s85
      %91 = dma.hbm_to_vmem [thread:$0]  %s9, 1024, %s86, [#allocation10], 64, 64, 4
    $region41: #{crop_model_forward.1} parent=1 // pred_fallthru
      _
    // Predicated region
    $region42: #{crop_model_forward.1} parent=1 // pred_check
      _
    $region43: #{crop_model_forward.1} parent=1 // pred_check_branch
      %93 = sbr.rel (0) target = $region45
    $region44: #{crop_model_forward.1} parent=1 // pred_region
      _
    $region45: #{crop_model_forward.1} parent=1 // pred_fallthru
      _
    // Predicated region
    $region46: #{crop_model_forward.1} parent=1 // pred_check
      _
    $region47: #{crop_model_forward.1} parent=1 // pred_check_branch
      %95 = sbr.rel (0) target = $region49
    $region48: #{crop_model_forward.1} parent=1 // pred_region
      %s97 = ssub.s32 1024, 1024
      %98 = vsyncadd [#allocation13], %s97
      %s99 = sshll.u32 [#allocation12], 4
      %s100 = int_to_ptr.vmem [resolvable:$true] %s99
      %105 = dma.hbm_to_vmem [thread:$0]  %s11, 1024, %s100, [#allocation13], 64, 64, 4
    $region49: #{crop_model_forward.1} parent=1 // pred_fallthru
      _
    // Predicated region
    $region50: #{crop_model_forward.1} parent=1 // pred_check
      _
    $region51: #{crop_model_forward.1} parent=1 // pred_check_branch
      %107 = sbr.rel (0) target = $region53
    $region52: #{crop_model_forward.1} parent=1 // pred_region
      _
    $region53: #{crop_model_forward.1} parent=1 // pred_fallthru
      _
    // Predicated region
    $region54: #{crop_model_forward.1} parent=1 // pred_check
      _
    $region55: #{crop_model_forward.1} parent=1 // pred_check_branch
      %109 = sbr.rel (0) target = $region57
    $region56: #{crop_model_forward.1} parent=1 // pred_region
      %110 = dma.done [#allocation5], 1024
    $region57: #{crop_model_forward.1} parent=1 // pred_fallthru
      _
    // Predicated region
    $region58: #{crop_model_forward.1} parent=1 // pred_check
      _
    $region59: #{crop_model_forward.1} parent=1 // pred_check_branch
      %112 = sbr.rel (0) target = $region61
    $region60: #{crop_model_forward.1} parent=1 // pred_region
      %113 = dma.done [#allocation7], 8192
    $region61: #{crop_model_forward.1} parent=1 // pred_fallthru
      _
    // Predicated region
    $region62: #{crop_model_forward.1} parent=1 // pred_check
      _
    $region63: #{crop_model_forward.1} parent=1 // pred_check_branch
      %115 = sbr.rel (0) target = $region65
    $region64: #{crop_model_forward.1} parent=1 // pred_region
      %116 = dma.done [#allocation7], 2048
    $region65: #{crop_model_forward.1} parent=1 // pred_fallthru
      _
    // Predicated region
    $region66: #{crop_model_forward.1} parent=1 // pred_check
      _
    $region67: #{crop_model_forward.1} parent=1 // pred_check_branch
      %118 = sbr.rel (0) target = $region69
    $region68: #{crop_model_forward.1} parent=1 // pred_region
      %119 = dma.done [#allocation10], 1024
    $region69: #{crop_model_forward.1} parent=1 // pred_fallthru
      _
    // Predicated region
    $region70: #{crop_model_forward.1} parent=1 // pred_check
      _
    $region71: #{crop_model_forward.1} parent=1 // pred_check_branch
      %121 = sbr.rel (0) target = $region73
    $region72: #{crop_model_forward.1} parent=1 // pred_region
      %122 = dma.done [#allocation10], 1024
    $region73: #{crop_model_forward.1} parent=1 // pred_fallthru
      _
    // Predicated region
    $region74: #{crop_model_forward.1} parent=1 // pred_check
      _
    $region75: #{crop_model_forward.1} parent=1 // pred_check_branch
      %124 = sbr.rel (0) target = $region77
    $region76: #{crop_model_forward.1} parent=1 // pred_region
      %125 = dma.done [#allocation13], 1024
    $region77: #{crop_model_forward.1} parent=1 // pred_fallthru
      _
    %v127 = vld [vmem:[%s0] sm:$0xf]
    %v128 = vld [vmem:[#allocation4] sm:$0xff]
    %v129 = vld [vmem:[#allocation4 + $0x8] sm:$0xff]
    %v130 = vld [vmem:[#allocation4 + $0x10] sm:$0xff]
    %v131 = vld [vmem:[#allocation4 + $0x18] sm:$0xff]
    %v132 = vld [vmem:[#allocation4 + $0x20] sm:$0xff]
    %v133 = vld [vmem:[#allocation4 + $0x28] sm:$0xff]
    %v134 = vld [vmem:[#allocation4 + $0x30] sm:$0xff]
    %v135 = vld [vmem:[#allocation4 + $0x38] sm:$0xff]
    %v136 = vld [vmem:[%s2] sm:$0xf]
    %v138 = vlaneseq
    %v139 = vshrl.u32 %v138, 7
    %v140 = vsub.s32 0, %v139
    %v141 = vrot.slane %v136, %v140
    %v142 = vlaneseq
    %v143 = vshrl.u32 %v142, 7
    %v144 = vsub.s32 1, %v143
    %v145 = vrot.slane %v136, %v144
    %v146 = vlaneseq
    %v147 = vshrl.u32 %v146, 7
    %v148 = vsub.s32 2, %v147
    %v149 = vrot.slane %v136, %v148
    %v150 = vlaneseq
    %v151 = vshrl.u32 %v150, 7
    %v152 = vsub.s32 3, %v151
    %v153 = vrot.slane %v136, %v152
    %v166 = vunpack.c.l.b16 %v128
    %v167 = vunpack.c.h.b16 %v128
    %v168 = vunpack.c.l.b16 %v129
    %v169 = vunpack.c.h.b16 %v129
    %v170 = vunpack.c.l.b16 %v130
    %v171 = vunpack.c.h.b16 %v130
    %v172 = vunpack.c.l.b16 %v131
    %v173 = vunpack.c.h.b16 %v131
    %v174 = vunpack.c.l.b16 %v132
    %v175 = vunpack.c.h.b16 %v132
    %v176 = vunpack.c.l.b16 %v133
    %v177 = vunpack.c.h.b16 %v133
    %v178 = vunpack.c.l.b16 %v134
    %v179 = vunpack.c.h.b16 %v134
    %v180 = vunpack.c.l.b16 %v135
    %v181 = vunpack.c.h.b16 %v135
    %v182 = vpack.c.b16 %v170, %v166
    %v183 = vpack.c.b16 %v171, %v167
    %v184 = vpack.c.b16 %v172, %v168
    %v185 = vpack.c.b16 %v173, %v169
    %v186 = vpack.c.b16 %v178, %v174
    %v187 = vpack.c.b16 %v179, %v175
    %v188 = vpack.c.b16 %v180, %v176
    %v189 = vpack.c.b16 %v181, %v177
    %vm198 = vcmask 261120
    %v200 = vsel %vm198, %v127, 0
    %202 = vmatprep.subr.bf16.mxu0 %v183
    %203 = vmatpush1.bf16.msra.mxu0 %v182
    %204 = vmatprep.subr.bf16.mxu0 %v187
    %205 = vmatpush1.bf16.msra.mxu0 %v186
    %206 = vmatprep.subr.bf16.mxu0 0
    %207 = vmatpush1.bf16.msra.mxu0 0
    %208 = vmatprep.subr.bf16.mxu0 0
    %209 = vmatpush1.bf16.msra.mxu0 0
    %210 = vmatprep.subr.bf16.mxu0 0
    %211 = vmatpush1.bf16.msra.mxu0 0
    %212 = vmatprep.subr.bf16.mxu0 0
    %213 = vmatpush1.bf16.msra.mxu0 0
    %214 = vmatprep.subr.bf16.mxu0 0
    %215 = vmatpush1.bf16.msra.mxu0 0
    %216 = vmatprep.subr.bf16.mxu0 0
    %217 = vmatpush1.bf16.msra.mxu0 0
    %218 = vmatprep.subr.bf16.mxu0 0
    %219 = vmatpush1.bf16.msra.mxu0 0
    %220 = vmatprep.subr.bf16.mxu0 0
    %221 = vmatpush1.bf16.msra.mxu0 0
    %222 = vmatprep.subr.bf16.mxu0 0
    %223 = vmatpush1.bf16.msra.mxu0 0
    %224 = vmatprep.subr.bf16.mxu0 0
    %225 = vmatpush1.bf16.msra.mxu0 0
    %226 = vmatprep.subr.bf16.mxu0 0
    %227 = vmatpush1.bf16.msra.mxu0 0
    %228 = vmatprep.subr.bf16.mxu0 0
    %229 = vmatpush1.bf16.msra.mxu0 0
    %230 = vmatprep.subr.bf16.mxu0 0
    %231 = vmatpush1.bf16.msra.mxu0 0
    %232 = vmatprep.subr.bf16.mxu0 0
    %233 = vmatpush1.bf16.msra.mxu0 0
    %234 = vmatprep.mubr.bf16.mxu0 0
    %235 = vmatmul.mubr.bf16.gmra.mrb[0].mxu0 %v200
    %v236 = vpop.f32.mrb[0].mxu0
    %v237 = vadd.f32 %v141, %v236
    %v238 = vpop.f32.mrb[0].mxu0
    %v239 = vadd.f32 %v145, %v238
    %v240 = vpop.f32.mrb[0].mxu0
    %v241 = vpop.f32.mrb[0].mxu0
    %242 = vdwg.mxu0
    %243 = vmatprep.subr.bf16.mxu0 %v185
    %244 = vmatpush1.bf16.msra.mxu0 %v184
    %245 = vmatprep.subr.bf16.mxu0 %v189
    %246 = vmatpush1.bf16.msra.mxu0 %v188
    %247 = vmatprep.subr.bf16.mxu0 0
    %248 = vmatpush1.bf16.msra.mxu0 0
    %249 = vmatprep.subr.bf16.mxu0 0
    %250 = vmatpush1.bf16.msra.mxu0 0
    %251 = vmatprep.subr.bf16.mxu0 0
    %252 = vmatpush1.bf16.msra.mxu0 0
    %253 = vmatprep.subr.bf16.mxu0 0
    %254 = vmatpush1.bf16.msra.mxu0 0
    %255 = vmatprep.subr.bf16.mxu0 0
    %256 = vmatpush1.bf16.msra.mxu0 0
    %257 = vmatprep.subr.bf16.mxu0 0
    %258 = vmatpush1.bf16.msra.mxu0 0
    %259 = vmatprep.subr.bf16.mxu0 0
    %260 = vmatpush1.bf16.msra.mxu0 0
    %261 = vmatprep.subr.bf16.mxu0 0
    %262 = vmatpush1.bf16.msra.mxu0 0
    %263 = vmatprep.subr.bf16.mxu0 0
    %264 = vmatpush1.bf16.msra.mxu0 0
    %265 = vmatprep.subr.bf16.mxu0 0
    %266 = vmatpush1.bf16.msra.mxu0 0
    %267 = vmatprep.subr.bf16.mxu0 0
    %268 = vmatpush1.bf16.msra.mxu0 0
    %269 = vmatprep.subr.bf16.mxu0 0
    %270 = vmatpush1.bf16.msra.mxu0 0
    %271 = vmatprep.subr.bf16.mxu0 0
    %272 = vmatpush1.bf16.msra.mxu0 0
    %273 = vmatprep.subr.bf16.mxu0 0
    %274 = vmatpush1.bf16.msra.mxu0 0
    %275 = vmatprep.mubr.bf16.mxu0 0
    %276 = vmatmul.mubr.bf16.gmra.mrb[0].mxu0 %v200
    %v277 = vpop.f32.mrb[0].mxu0
    %v278 = vadd.f32 %v149, %v277
    %v279 = vpop.f32.mrb[0].mxu0
    %v280 = vadd.f32 %v153, %v279
    %v281 = vpop.f32.mrb[0].mxu0
    %v282 = vpop.f32.mrb[0].mxu0
    %283 = vdwg.mxu0
    %v284 = vmax.f32 %v237, 0.0
    %v285 = vmax.f32 %v239, 0.0
    %v286 = vmax.f32 %v278, 0.0
    %v287 = vmax.f32 %v280, 0.0
    %v288 = vpack.c.bf16 %v284, %v284
    %v289 = vpack.c.bf16 %v285, %v285
    %v290 = vpack.c.bf16 %v286, %v286
    %v291 = vpack.c.bf16 %v287, %v287
    %v296 = vunpack.c.l.b16 %v288
    %v297 = vunpack.c.l.b16 %v289
    %v298 = vunpack.c.l.b16 %v290
    %v299 = vunpack.c.l.b16 %v291
    %v300 = vpack.c.b16 %v297, %v296
    %v301 = vpack.c.b16 %v299, %v298
    %304 = vst [vmem:[#allocation2] sm:$0xff] %v300
    %305 = vst [vmem:[#allocation2 + $0x8] sm:$0xff] %v301
    %v306 = vld [vmem:[#allocation2] sm:$0xff]
    %v307 = vld [vmem:[#allocation2 + $0x8] sm:$0xff]
    %v308 = vld [vmem:[#allocation6] sm:$0xff]
    %v309 = vld [vmem:[#allocation6 + $0x8] sm:$0xff]
    %v310 = vld [vmem:[#allocation6 + $0x10] sm:$0xff]
    %v311 = vld [vmem:[#allocation6 + $0x18] sm:$0xff]
    %v312 = vld [vmem:[#allocation6 + $0x20] sm:$0xff]
    %v313 = vld [vmem:[#allocation6 + $0x28] sm:$0xff]
    %v314 = vld [vmem:[#allocation6 + $0x30] sm:$0xff]
    %v315 = vld [vmem:[#allocation6 + $0x38] sm:$0xff]
    %v316 = vld [vmem:[#allocation6 + $0x40] sm:$0xff]
    %v317 = vld [vmem:[#allocation6 + $0x48] sm:$0xff]
    %v318 = vld [vmem:[#allocation6 + $0x50] sm:$0xff]
    %v319 = vld [vmem:[#allocation6 + $0x58] sm:$0xff]
    %v320 = vld [vmem:[#allocation6 + $0x60] sm:$0xff]
    %v321 = vld [vmem:[#allocation6 + $0x68] sm:$0xff]
    %v322 = vld [vmem:[#allocation6 + $0x70] sm:$0xff]
    %v323 = vld [vmem:[#allocation6 + $0x78] sm:$0xff]
    %v324 = vld [vmem:[#allocation6 + $0x80] sm:$0xff]
    %v325 = vld [vmem:[#allocation6 + $0x88] sm:$0xff]
    %v326 = vld [vmem:[#allocation6 + $0x90] sm:$0xff]
    %v327 = vld [vmem:[#allocation6 + $0x98] sm:$0xff]
    %v328 = vld [vmem:[#allocation6 + $0xa0] sm:$0xff]
    %v329 = vld [vmem:[#allocation6 + $0xa8] sm:$0xff]
    %v330 = vld [vmem:[#allocation6 + $0xb0] sm:$0xff]
    %v331 = vld [vmem:[#allocation6 + $0xb8] sm:$0xff]
    %v332 = vld [vmem:[#allocation6 + $0xc0] sm:$0xff]
    %v333 = vld [vmem:[#allocation6 + $0xc8] sm:$0xff]
    %v334 = vld [vmem:[#allocation6 + $0xd0] sm:$0xff]
    %v335 = vld [vmem:[#allocation6 + $0xd8] sm:$0xff]
    %v336 = vld [vmem:[#allocation6 + $0xe0] sm:$0xff]
    %v337 = vld [vmem:[#allocation6 + $0xe8] sm:$0xff]
    %v338 = vld [vmem:[#allocation6 + $0xf0] sm:$0xff]
    %v339 = vld [vmem:[#allocation6 + $0xf8] sm:$0xff]
    %v340 = vld [vmem:[#allocation6 + $0x100] sm:$0xff]
    %v341 = vld [vmem:[#allocation6 + $0x108] sm:$0xff]
    %v342 = vld [vmem:[#allocation6 + $0x110] sm:$0xff]
    %v343 = vld [vmem:[#allocation6 + $0x118] sm:$0xff]
    %v344 = vld [vmem:[#allocation6 + $0x120] sm:$0xff]
    %v345 = vld [vmem:[#allocation6 + $0x128] sm:$0xff]
    %v346 = vld [vmem:[#allocation6 + $0x130] sm:$0xff]
    %v347 = vld [vmem:[#allocation6 + $0x138] sm:$0xff]
    %v348 = vld [vmem:[#allocation6 + $0x140] sm:$0xff]
    %v349 = vld [vmem:[#allocation6 + $0x148] sm:$0xff]
    %v350 = vld [vmem:[#allocation6 + $0x150] sm:$0xff]
    %v351 = vld [vmem:[#allocation6 + $0x158] sm:$0xff]
    %v352 = vld [vmem:[#allocation6 + $0x160] sm:$0xff]
    %v353 = vld [vmem:[#allocation6 + $0x168] sm:$0xff]
    %v354 = vld [vmem:[#allocation6 + $0x170] sm:$0xff]
    %v355 = vld [vmem:[#allocation6 + $0x178] sm:$0xff]
    %v356 = vld [vmem:[#allocation6 + $0x180] sm:$0xff]
    %v357 = vld [vmem:[#allocation6 + $0x188] sm:$0xff]
    %v358 = vld [vmem:[#allocation6 + $0x190] sm:$0xff]
    %v359 = vld [vmem:[#allocation6 + $0x198] sm:$0xff]
    %v360 = vld [vmem:[#allocation6 + $0x1a0] sm:$0xff]
    %v361 = vld [vmem:[#allocation6 + $0x1a8] sm:$0xff]
    %v362 = vld [vmem:[#allocation6 + $0x1b0] sm:$0xff]
    %v363 = vld [vmem:[#allocation6 + $0x1b8] sm:$0xff]
    %v364 = vld [vmem:[#allocation6 + $0x1c0] sm:$0xff]
    %v365 = vld [vmem:[#allocation6 + $0x1c8] sm:$0xff]
    %v366 = vld [vmem:[#allocation6 + $0x1d0] sm:$0xff]
    %v367 = vld [vmem:[#allocation6 + $0x1d8] sm:$0xff]
    %v368 = vld [vmem:[#allocation6 + $0x1e0] sm:$0xff]
    %v369 = vld [vmem:[#allocation6 + $0x1e8] sm:$0xff]
    %v370 = vld [vmem:[#allocation6 + $0x1f0] sm:$0xff]
    %v371 = vld [vmem:[#allocation6 + $0x1f8] sm:$0xff]
    %v372 = vld [vmem:[%s4] sm:$0x3]
    %v374 = vlaneseq
    %v375 = vshrl.u32 %v374, 7
    %v376 = vsub.s32 0, %v375
    %v377 = vrot.slane %v372, %v376
    %v378 = vlaneseq
    %v379 = vshrl.u32 %v378, 7
    %v380 = vsub.s32 1, %v379
    %v381 = vrot.slane %v372, %v380
    %v386 = vunpack.c.l.b16 %v306
    %v387 = vunpack.c.h.b16 %v306
    %v388 = vunpack.c.l.b16 %v307
    %v389 = vunpack.c.h.b16 %v307
    %v390 = vpack.c.b16 %v386, %v386
    %v391 = vpack.c.b16 %v387, %v387
    %v392 = vpack.c.b16 %v388, %v388
    %v393 = vpack.c.b16 %v389, %v389
    %v462 = vunpack.c.l.b16 %v308
    %v463 = vunpack.c.h.b16 %v308
    %v464 = vunpack.c.l.b16 %v309
    %v465 = vunpack.c.h.b16 %v309
    %v466 = vunpack.c.l.b16 %v310
    %v467 = vunpack.c.h.b16 %v310
    %v468 = vunpack.c.l.b16 %v311
    %v469 = vunpack.c.h.b16 %v311
    %v470 = vunpack.c.l.b16 %v312
    %v471 = vunpack.c.h.b16 %v312
    %v472 = vunpack.c.l.b16 %v313
    %v473 = vunpack.c.h.b16 %v313
    %v474 = vunpack.c.l.b16 %v314
    %v475 = vunpack.c.h.b16 %v314
    %v476 = vunpack.c.l.b16 %v315
    %v477 = vunpack.c.h.b16 %v315
    %v478 = vunpack.c.l.b16 %v316
    %v479 = vunpack.c.h.b16 %v316
    %v480 = vunpack.c.l.b16 %v317
    %v481 = vunpack.c.h.b16 %v317
    %v482 = vunpack.c.l.b16 %v318
    %v483 = vunpack.c.h.b16 %v318
    %v484 = vunpack.c.l.b16 %v319
    %v485 = vunpack.c.h.b16 %v319
    %v486 = vunpack.c.l.b16 %v320
    %v487 = vunpack.c.h.b16 %v320
    %v488 = vunpack.c.l.b16 %v321
    %v489 = vunpack.c.h.b16 %v321
    %v490 = vunpack.c.l.b16 %v322
    %v491 = vunpack.c.h.b16 %v322
    %v492 = vunpack.c.l.b16 %v323
    %v493 = vunpack.c.h.b16 %v323
    %v494 = vunpack.c.l.b16 %v324
    %v495 = vunpack.c.h.b16 %v324
    %v496 = vunpack.c.l.b16 %v325
    %v497 = vunpack.c.h.b16 %v325
    %v498 = vunpack.c.l.b16 %v326
    %v499 = vunpack.c.h.b16 %v326
    %v500 = vunpack.c.l.b16 %v327
    %v501 = vunpack.c.h.b16 %v327
    %v502 = vunpack.c.l.b16 %v328
    %v503 = vunpack.c.h.b16 %v328
    %v504 = vunpack.c.l.b16 %v329
    %v505 = vunpack.c.h.b16 %v329
    %v506 = vunpack.c.l.b16 %v330
    %v507 = vunpack.c.h.b16 %v330
    %v508 = vunpack.c.l.b16 %v331
    %v509 = vunpack.c.h.b16 %v331
    %v510 = vunpack.c.l.b16 %v332
    %v511 = vunpack.c.h.b16 %v332
    %v512 = vunpack.c.l.b16 %v333
    %v513 = vunpack.c.h.b16 %v333
    %v514 = vunpack.c.l.b16 %v334
    %v515 = vunpack.c.h.b16 %v334
    %v516 = vunpack.c.l.b16 %v335
    %v517 = vunpack.c.h.b16 %v335
    %v518 = vunpack.c.l.b16 %v336
    %v519 = vunpack.c.h.b16 %v336
    %v520 = vunpack.c.l.b16 %v337
    %v521 = vunpack.c.h.b16 %v337
    %v522 = vunpack.c.l.b16 %v338
    %v523 = vunpack.c.h.b16 %v338
    %v524 = vunpack.c.l.b16 %v339
    %v525 = vunpack.c.h.b16 %v339
    %v526 = vunpack.c.l.b16 %v340
    %v527 = vunpack.c.h.b16 %v340
    %v528 = vunpack.c.l.b16 %v341
    %v529 = vunpack.c.h.b16 %v341
    %v530 = vunpack.c.l.b16 %v342
    %v531 = vunpack.c.h.b16 %v342
    %v532 = vunpack.c.l.b16 %v343
    %v533 = vunpack.c.h.b16 %v343
    %v534 = vunpack.c.l.b16 %v344
    %v535 = vunpack.c.h.b16 %v344
    %v536 = vunpack.c.l.b16 %v345
    %v537 = vunpack.c.h.b16 %v345
    %v538 = vunpack.c.l.b16 %v346
    %v539 = vunpack.c.h.b16 %v346
    %v540 = vunpack.c.l.b16 %v347
    %v541 = vunpack.c.h.b16 %v347
    %v542 = vunpack.c.l.b16 %v348
    %v543 = vunpack.c.h.b16 %v348
    %v544 = vunpack.c.l.b16 %v349
    %v545 = vunpack.c.h.b16 %v349
    %v546 = vunpack.c.l.b16 %v350
    %v547 = vunpack.c.h.b16 %v350
    %v548 = vunpack.c.l.b16 %v351
    %v549 = vunpack.c.h.b16 %v351
    %v550 = vunpack.c.l.b16 %v352
    %v551 = vunpack.c.h.b16 %v352
    %v552 = vunpack.c.l.b16 %v353
    %v553 = vunpack.c.h.b16 %v353
    %v554 = vunpack.c.l.b16 %v354
    %v555 = vunpack.c.h.b16 %v354
    %v556 = vunpack.c.l.b16 %v355
    %v557 = vunpack.c.h.b16 %v355
    %v558 = vunpack.c.l.b16 %v356
    %v559 = vunpack.c.h.b16 %v356
    %v560 = vunpack.c.l.b16 %v357
    %v561 = vunpack.c.h.b16 %v357
    %v562 = vunpack.c.l.b16 %v358
    %v563 = vunpack.c.h.b16 %v358
    %v564 = vunpack.c.l.b16 %v359
    %v565 = vunpack.c.h.b16 %v359
    %v566 = vunpack.c.l.b16 %v360
    %v567 = vunpack.c.h.b16 %v360
    %v568 = vunpack.c.l.b16 %v361
    %v569 = vunpack.c.h.b16 %v361
    %v570 = vunpack.c.l.b16 %v362
    %v571 = vunpack.c.h.b16 %v362
    %v572 = vunpack.c.l.b16 %v363
    %v573 = vunpack.c.h.b16 %v363
    %v574 = vunpack.c.l.b16 %v364
    %v575 = vunpack.c.h.b16 %v364
    %v576 = vunpack.c.l.b16 %v365
    %v577 = vunpack.c.h.b16 %v365
    %v578 = vunpack.c.l.b16 %v366
    %v579 = vunpack.c.h.b16 %v366
    %v580 = vunpack.c.l.b16 %v367
    %v581 = vunpack.c.h.b16 %v367
    %v582 = vunpack.c.l.b16 %v368
    %v583 = vunpack.c.h.b16 %v368
    %v584 = vunpack.c.l.b16 %v369
    %v585 = vunpack.c.h.b16 %v369
    %v586 = vunpack.c.l.b16 %v370
    %v587 = vunpack.c.h.b16 %v370
    %v588 = vunpack.c.l.b16 %v371
    %v589 = vunpack.c.h.b16 %v371
    %v590 = vpack.c.b16 %v464, %v462
    %v591 = vpack.c.b16 %v465, %v463
    %v592 = vpack.c.b16 %v468, %v466
    %v593 = vpack.c.b16 %v469, %v467
    %v594 = vpack.c.b16 %v472, %v470
    %v595 = vpack.c.b16 %v473, %v471
    %v596 = vpack.c.b16 %v476, %v474
    %v597 = vpack.c.b16 %v477, %v475
    %v598 = vpack.c.b16 %v480, %v478
    %v599 = vpack.c.b16 %v481, %v479
    %v600 = vpack.c.b16 %v484, %v482
    %v601 = vpack.c.b16 %v485, %v483
    %v602 = vpack.c.b16 %v488, %v486
    %v603 = vpack.c.b16 %v489, %v487
    %v604 = vpack.c.b16 %v492, %v490
    %v605 = vpack.c.b16 %v493, %v491
    %v606 = vpack.c.b16 %v496, %v494
    %v607 = vpack.c.b16 %v497, %v495
    %v608 = vpack.c.b16 %v500, %v498
    %v609 = vpack.c.b16 %v501, %v499
    %v610 = vpack.c.b16 %v504, %v502
    %v611 = vpack.c.b16 %v505, %v503
    %v612 = vpack.c.b16 %v508, %v506
    %v613 = vpack.c.b16 %v509, %v507
    %v614 = vpack.c.b16 %v512, %v510
    %v615 = vpack.c.b16 %v513, %v511
    %v616 = vpack.c.b16 %v516, %v514
    %v617 = vpack.c.b16 %v517, %v515
    %v618 = vpack.c.b16 %v520, %v518
    %v619 = vpack.c.b16 %v521, %v519
    %v620 = vpack.c.b16 %v524, %v522
    %v621 = vpack.c.b16 %v525, %v523
    %v622 = vpack.c.b16 %v528, %v526
    %v623 = vpack.c.b16 %v529, %v527
    %v624 = vpack.c.b16 %v532, %v530
    %v625 = vpack.c.b16 %v533, %v531
    %v626 = vpack.c.b16 %v536, %v534
    %v627 = vpack.c.b16 %v537, %v535
    %v628 = vpack.c.b16 %v540, %v538
    %v629 = vpack.c.b16 %v541, %v539
    %v630 = vpack.c.b16 %v544, %v542
    %v631 = vpack.c.b16 %v545, %v543
    %v632 = vpack.c.b16 %v548, %v546
    %v633 = vpack.c.b16 %v549, %v547
    %v634 = vpack.c.b16 %v552, %v550
    %v635 = vpack.c.b16 %v553, %v551
    %v636 = vpack.c.b16 %v556, %v554
    %v637 = vpack.c.b16 %v557, %v555
    %v638 = vpack.c.b16 %v560, %v558
    %v639 = vpack.c.b16 %v561, %v559
    %v640 = vpack.c.b16 %v564, %v562
    %v641 = vpack.c.b16 %v565, %v563
    %v642 = vpack.c.b16 %v568, %v566
    %v643 = vpack.c.b16 %v569, %v567
    %v644 = vpack.c.b16 %v572, %v570
    %v645 = vpack.c.b16 %v573, %v571
    %v646 = vpack.c.b16 %v576, %v574
    %v647 = vpack.c.b16 %v577, %v575
    %v648 = vpack.c.b16 %v580, %v578
    %v649 = vpack.c.b16 %v581, %v579
    %v650 = vpack.c.b16 %v584, %v582
    %v651 = vpack.c.b16 %v585, %v583
    %v652 = vpack.c.b16 %v588, %v586
    %v653 = vpack.c.b16 %v589, %v587
    %718 = vmatprep.subr.bf16.mxu0 %v591
    %719 = vmatpush1.bf16.msra.mxu0 %v590
    %720 = vmatprep.subr.bf16.mxu0 %v593
    %721 = vmatpush1.bf16.msra.mxu0 %v592
    %722 = vmatprep.subr.bf16.mxu0 %v595
    %723 = vmatpush1.bf16.msra.mxu0 %v594
    %724 = vmatprep.subr.bf16.mxu0 %v597
    %725 = vmatpush1.bf16.msra.mxu0 %v596
    %726 = vmatprep.subr.bf16.mxu0 %v599
    %727 = vmatpush1.bf16.msra.mxu0 %v598
    %728 = vmatprep.subr.bf16.mxu0 %v601
    %729 = vmatpush1.bf16.msra.mxu0 %v600
    %730 = vmatprep.subr.bf16.mxu0 %v603
    %731 = vmatpush1.bf16.msra.mxu0 %v602
    %732 = vmatprep.subr.bf16.mxu0 %v605
    %733 = vmatpush1.bf16.msra.mxu0 %v604
    %734 = vmatprep.subr.bf16.mxu0 %v607
    %735 = vmatpush1.bf16.msra.mxu0 %v606
    %736 = vmatprep.subr.bf16.mxu0 %v609
    %737 = vmatpush1.bf16.msra.mxu0 %v608
    %738 = vmatprep.subr.bf16.mxu0 %v611
    %739 = vmatpush1.bf16.msra.mxu0 %v610
    %740 = vmatprep.subr.bf16.mxu0 %v613
    %741 = vmatpush1.bf16.msra.mxu0 %v612
    %742 = vmatprep.subr.bf16.mxu0 %v615
    %743 = vmatpush1.bf16.msra.mxu0 %v614
    %744 = vmatprep.subr.bf16.mxu0 %v617
    %745 = vmatpush1.bf16.msra.mxu0 %v616
    %746 = vmatprep.subr.bf16.mxu0 %v619
    %747 = vmatpush1.bf16.msra.mxu0 %v618
    %748 = vmatprep.subr.bf16.mxu0 %v621
    %749 = vmatpush1.bf16.msra.mxu0 %v620
    %750 = vmatprep.mubr.bf16.mxu0 %v391
    %751 = vmatmul.mubr.bf16.gmra.mrb[0].mxu0 %v390
    %v752 = vpop.f32.mrb[0].mxu0
    %v753 = vadd.f32 %v377, %v752
    %v754 = vpop.f32.mrb[0].mxu0
    %v755 = vadd.f32 %v381, %v754
    %v756 = vpop.f32.mrb[0].mxu0
    %v757 = vpop.f32.mrb[0].mxu0
    %758 = vdwg.mxu0
    %759 = vmatprep.subr.bf16.mxu0 %v623
    %760 = vmatpush1.bf16.msra.mxu0 %v622
    %761 = vmatprep.subr.bf16.mxu0 %v625
    %762 = vmatpush1.bf16.msra.mxu0 %v624
    %763 = vmatprep.subr.bf16.mxu0 %v627
    %764 = vmatpush1.bf16.msra.mxu0 %v626
    %765 = vmatprep.subr.bf16.mxu0 %v629
    %766 = vmatpush1.bf16.msra.mxu0 %v628
    %767 = vmatprep.subr.bf16.mxu0 %v631
    %768 = vmatpush1.bf16.msra.mxu0 %v630
    %769 = vmatprep.subr.bf16.mxu0 %v633
    %770 = vmatpush1.bf16.msra.mxu0 %v632
    %771 = vmatprep.subr.bf16.mxu0 %v635
    %772 = vmatpush1.bf16.msra.mxu0 %v634
    %773 = vmatprep.subr.bf16.mxu0 %v637
    %774 = vmatpush1.bf16.msra.mxu0 %v636
    %775 = vmatprep.subr.bf16.mxu0 %v639
    %776 = vmatpush1.bf16.msra.mxu0 %v638
    %777 = vmatprep.subr.bf16.mxu0 %v641
    %778 = vmatpush1.bf16.msra.mxu0 %v640
    %779 = vmatprep.subr.bf16.mxu0 %v643
    %780 = vmatpush1.bf16.msra.mxu0 %v642
    %781 = vmatprep.subr.bf16.mxu0 %v645
    %782 = vmatpush1.bf16.msra.mxu0 %v644
    %783 = vmatprep.subr.bf16.mxu0 %v647
    %784 = vmatpush1.bf16.msra.mxu0 %v646
    %785 = vmatprep.subr.bf16.mxu0 %v649
    %786 = vmatpush1.bf16.msra.mxu0 %v648
    %787 = vmatprep.subr.bf16.mxu0 %v651
    %788 = vmatpush1.bf16.msra.mxu0 %v650
    %789 = vmatprep.subr.bf16.mxu0 %v653
    %790 = vmatpush1.bf16.msra.mxu0 %v652
    %791 = vmatprep.mubr.bf16.mxu0 %v393
    %792 = vmatmul.mubr.bf16.gmra.mrb[0].mxu0 %v392
    %v793 = vpop.f32.mrb[0].mxu0
    %v794 = vadd.f32 %v753, %v793
    %v795 = vpop.f32.mrb[0].mxu0
    %v796 = vadd.f32 %v755, %v795
    %v797 = vpop.f32.mrb[0].mxu0
    %v798 = vpop.f32.mrb[0].mxu0
    %799 = vdwg.mxu0
    %v800 = vmax.f32 %v794, 0.0
    %v801 = vmax.f32 %v796, 0.0
    %v802 = vpack.c.bf16 %v800, %v800
    %v803 = vpack.c.bf16 %v801, %v801
    %v806 = vunpack.c.l.b16 %v802
    %v807 = vunpack.c.l.b16 %v803
    %v808 = vpack.c.b16 %v807, %v806
    %810 = vst [vmem:[#allocation3] sm:$0xff] %v808
    %v811 = vld [vmem:[#allocation3] sm:$0xff]
    %v812 = vld [vmem:[#allocation8] sm:$0xf]
    %v813 = vld [vmem:[#allocation8 + $0x4] sm:$0xf]
    %v814 = vld [vmem:[#allocation8 + $0x8] sm:$0xf]
    %v815 = vld [vmem:[#allocation8 + $0xc] sm:$0xf]
    %v816 = vld [vmem:[#allocation8 + $0x10] sm:$0xf]
    %v817 = vld [vmem:[#allocation8 + $0x14] sm:$0xf]
    %v818 = vld [vmem:[#allocation8 + $0x18] sm:$0xf]
    %v819 = vld [vmem:[#allocation8 + $0x1c] sm:$0xf]
    %v820 = vld [vmem:[#allocation8 + $0x20] sm:$0xf]
    %v821 = vld [vmem:[#allocation8 + $0x24] sm:$0xf]
    %v822 = vld [vmem:[#allocation8 + $0x28] sm:$0xf]
    %v823 = vld [vmem:[#allocation8 + $0x2c] sm:$0xf]
    %v824 = vld [vmem:[#allocation8 + $0x30] sm:$0xf]
    %v825 = vld [vmem:[#allocation8 + $0x34] sm:$0xf]
    %v826 = vld [vmem:[#allocation8 + $0x38] sm:$0xf]
    %v827 = vld [vmem:[#allocation8 + $0x3c] sm:$0xf]
    %v828 = vld [vmem:[#allocation8 + $0x40] sm:$0xf]
    %v829 = vld [vmem:[#allocation8 + $0x44] sm:$0xf]
    %v830 = vld [vmem:[#allocation8 + $0x48] sm:$0xf]
    %v831 = vld [vmem:[#allocation8 + $0x4c] sm:$0xf]
    %v832 = vld [vmem:[#allocation8 + $0x50] sm:$0xf]
    %v833 = vld [vmem:[#allocation8 + $0x54] sm:$0xf]
    %v834 = vld [vmem:[#allocation8 + $0x58] sm:$0xf]
    %v835 = vld [vmem:[#allocation8 + $0x5c] sm:$0xf]
    %v836 = vld [vmem:[#allocation8 + $0x60] sm:$0xf]
    %v837 = vld [vmem:[#allocation8 + $0x64] sm:$0xf]
    %v838 = vld [vmem:[#allocation8 + $0x68] sm:$0xf]
    %v839 = vld [vmem:[#allocation8 + $0x6c] sm:$0xf]
    %v840 = vld [vmem:[#allocation8 + $0x70] sm:$0xf]
    %v841 = vld [vmem:[#allocation8 + $0x74] sm:$0xf]
    %v842 = vld [vmem:[#allocation8 + $0x78] sm:$0xf]
    %v843 = vld [vmem:[#allocation8 + $0x7c] sm:$0xf]
    %v844 = vld [vmem:[%s6] sm:$0x1]
    %v846 = vlaneseq
    %v847 = vshrl.u32 %v846, 7
    %v848 = vsub.s32 0, %v847
    %v849 = vrot.slane %v844, %v848
    %v852 = vunpack.c.l.b16 %v811
    %v853 = vunpack.c.h.b16 %v811
    %v854 = vpack.c.b16 %v852, %v852
    %v855 = vpack.c.b16 %v853, %v853
    %v890 = vunpack.c.l.b16 %v812
    %v891 = vunpack.c.l.b16 %v813
    %v892 = vunpack.c.l.b16 %v814
    %v893 = vunpack.c.l.b16 %v815
    %v894 = vunpack.c.l.b16 %v816
    %v895 = vunpack.c.l.b16 %v817
    %v896 = vunpack.c.l.b16 %v818
    %v897 = vunpack.c.l.b16 %v819
    %v898 = vunpack.c.l.b16 %v820
    %v899 = vunpack.c.l.b16 %v821
    %v900 = vunpack.c.l.b16 %v822
    %v901 = vunpack.c.l.b16 %v823
    %v902 = vunpack.c.l.b16 %v824
    %v903 = vunpack.c.l.b16 %v825
    %v904 = vunpack.c.l.b16 %v826
    %v905 = vunpack.c.l.b16 %v827
    %v906 = vunpack.c.l.b16 %v828
    %v907 = vunpack.c.l.b16 %v829
    %v908 = vunpack.c.l.b16 %v830
    %v909 = vunpack.c.l.b16 %v831
    %v910 = vunpack.c.l.b16 %v832
    %v911 = vunpack.c.l.b16 %v833
    %v912 = vunpack.c.l.b16 %v834
    %v913 = vunpack.c.l.b16 %v835
    %v914 = vunpack.c.l.b16 %v836
    %v915 = vunpack.c.l.b16 %v837
    %v916 = vunpack.c.l.b16 %v838
    %v917 = vunpack.c.l.b16 %v839
    %v918 = vunpack.c.l.b16 %v840
    %v919 = vunpack.c.l.b16 %v841
    %v920 = vunpack.c.l.b16 %v842
    %v921 = vunpack.c.l.b16 %v843
    %v922 = vpack.c.b16 %v891, %v890
    %v923 = vpack.c.b16 %v893, %v892
    %v924 = vpack.c.b16 %v895, %v894
    %v925 = vpack.c.b16 %v897, %v896
    %v926 = vpack.c.b16 %v899, %v898
    %v927 = vpack.c.b16 %v901, %v900
    %v928 = vpack.c.b16 %v903, %v902
    %v929 = vpack.c.b16 %v905, %v904
    %v930 = vpack.c.b16 %v907, %v906
    %v931 = vpack.c.b16 %v909, %v908
    %v932 = vpack.c.b16 %v911, %v910
    %v933 = vpack.c.b16 %v913, %v912
    %v934 = vpack.c.b16 %v915, %v914
    %v935 = vpack.c.b16 %v917, %v916
    %v936 = vpack.c.b16 %v919, %v918
    %v937 = vpack.c.b16 %v921, %v920
    %954 = vmatprep.subr.bf16.mxu0 0
    %955 = vmatpush1.bf16.msra.mxu0 %v922
    %956 = vmatprep.subr.bf16.mxu0 0
    %957 = vmatpush1.bf16.msra.mxu0 %v923
    %958 = vmatprep.subr.bf16.mxu0 0
    %959 = vmatpush1.bf16.msra.mxu0 %v924
    %960 = vmatprep.subr.bf16.mxu0 0
    %961 = vmatpush1.bf16.msra.mxu0 %v925
    %962 = vmatprep.subr.bf16.mxu0 0
    %963 = vmatpush1.bf16.msra.mxu0 %v926
    %964 = vmatprep.subr.bf16.mxu0 0
    %965 = vmatpush1.bf16.msra.mxu0 %v927
    %966 = vmatprep.subr.bf16.mxu0 0
    %967 = vmatpush1.bf16.msra.mxu0 %v928
    %968 = vmatprep.subr.bf16.mxu0 0
    %969 = vmatpush1.bf16.msra.mxu0 %v929
    %970 = vmatprep.subr.bf16.mxu0 0
    %971 = vmatpush1.bf16.msra.mxu0 %v930
    %972 = vmatprep.subr.bf16.mxu0 0
    %973 = vmatpush1.bf16.msra.mxu0 %v931
    %974 = vmatprep.subr.bf16.mxu0 0
    %975 = vmatpush1.bf16.msra.mxu0 %v932
    %976 = vmatprep.subr.bf16.mxu0 0
    %977 = vmatpush1.bf16.msra.mxu0 %v933
    %978 = vmatprep.subr.bf16.mxu0 0
    %979 = vmatpush1.bf16.msra.mxu0 %v934
    %980 = vmatprep.subr.bf16.mxu0 0
    %981 = vmatpush1.bf16.msra.mxu0 %v935
    %982 = vmatprep.subr.bf16.mxu0 0
    %983 = vmatpush1.bf16.msra.mxu0 %v936
    %984 = vmatprep.subr.bf16.mxu0 0
    %985 = vmatpush1.bf16.msra.mxu0 %v937
    %986 = vmatprep.mubr.bf16.mxu0 %v855
    %987 = vmatmul.mubr.bf16.gmra.mrb[0].mxu0 %v854
    %v988 = vpop.f32.mrb[0].mxu0
    %v989 = vadd.f32 %v849, %v988
    %v990 = vpop.f32.mrb[0].mxu0
    %v991 = vpop.f32.mrb[0].mxu0
    %v992 = vpop.f32.mrb[0].mxu0
    %993 = vdwg.mxu0
    %v994 = vmax.f32 %v989, 0.0
    %v995 = vpack.c.bf16 %v994, %v994
    %996 = vst [vmem:[#allocation2] sm:$0xf] %v995
    %v997 = vld [vmem:[#allocation2] sm:$0xf]
    %v998 = vld [vmem:[#allocation9] sm:$0xf]
    %v999 = vld [vmem:[#allocation9 + $0x4] sm:$0xf]
    %v1000 = vld [vmem:[#allocation9 + $0x8] sm:$0xf]
    %v1001 = vld [vmem:[#allocation9 + $0xc] sm:$0xf]
    %v1002 = vld [vmem:[#allocation9 + $0x10] sm:$0xf]
    %v1003 = vld [vmem:[#allocation9 + $0x14] sm:$0xf]
    %v1004 = vld [vmem:[#allocation9 + $0x18] sm:$0xf]
    %v1005 = vld [vmem:[#allocation9 + $0x1c] sm:$0xf]
    %v1006 = vld [vmem:[#allocation9 + $0x20] sm:$0xf]
    %v1007 = vld [vmem:[#allocation9 + $0x24] sm:$0xf]
    %v1008 = vld [vmem:[#allocation9 + $0x28] sm:$0xf]
    %v1009 = vld [vmem:[#allocation9 + $0x2c] sm:$0xf]
    %v1010 = vld [vmem:[#allocation9 + $0x30] sm:$0xf]
    %v1011 = vld [vmem:[#allocation9 + $0x34] sm:$0xf]
    %v1012 = vld [vmem:[#allocation9 + $0x38] sm:$0xf]
    %v1013 = vld [vmem:[#allocation9 + $0x3c] sm:$0xf]
    %v1014 = vld [vmem:[%s8] sm:$0x1]
    %v1016 = vlaneseq
    %v1017 = vshrl.u32 %v1016, 7
    %v1018 = vsub.s32 0, %v1017
    %v1019 = vrot.slane %v1014, %v1018
    %v1037 = vunpack.c.l.b16 %v998
    %v1038 = vunpack.c.l.b16 %v999
    %v1039 = vunpack.c.l.b16 %v1000
    %v1040 = vunpack.c.l.b16 %v1001
    %v1041 = vunpack.c.l.b16 %v1002
    %v1042 = vunpack.c.l.b16 %v1003
    %v1043 = vunpack.c.l.b16 %v1004
    %v1044 = vunpack.c.l.b16 %v1005
    %v1045 = vunpack.c.l.b16 %v1006
    %v1046 = vunpack.c.l.b16 %v1007
    %v1047 = vunpack.c.l.b16 %v1008
    %v1048 = vunpack.c.l.b16 %v1009
    %v1049 = vunpack.c.l.b16 %v1010
    %v1050 = vunpack.c.l.b16 %v1011
    %v1051 = vunpack.c.l.b16 %v1012
    %v1052 = vunpack.c.l.b16 %v1013
    %v1053 = vpack.c.b16 %v1038, %v1037
    %v1054 = vpack.c.b16 %v1040, %v1039
    %v1055 = vpack.c.b16 %v1042, %v1041
    %v1056 = vpack.c.b16 %v1044, %v1043
    %v1057 = vpack.c.b16 %v1046, %v1045
    %v1058 = vpack.c.b16 %v1048, %v1047
    %v1059 = vpack.c.b16 %v1050, %v1049
    %v1060 = vpack.c.b16 %v1052, %v1051
    %1069 = vmatprep.subr.bf16.mxu0 0
    %1070 = vmatpush1.bf16.msra.mxu0 %v1053
    %1071 = vmatprep.subr.bf16.mxu0 0
    %1072 = vmatpush1.bf16.msra.mxu0 %v1054
    %1073 = vmatprep.subr.bf16.mxu0 0
    %1074 = vmatpush1.bf16.msra.mxu0 %v1055
    %1075 = vmatprep.subr.bf16.mxu0 0
    %1076 = vmatpush1.bf16.msra.mxu0 %v1056
    %1077 = vmatprep.subr.bf16.mxu0 0
    %1078 = vmatpush1.bf16.msra.mxu0 %v1057
    %1079 = vmatprep.subr.bf16.mxu0 0
    %1080 = vmatpush1.bf16.msra.mxu0 %v1058
    %1081 = vmatprep.subr.bf16.mxu0 0
    %1082 = vmatpush1.bf16.msra.mxu0 %v1059
    %1083 = vmatprep.subr.bf16.mxu0 0
    %1084 = vmatpush1.bf16.msra.mxu0 %v1060
    %1085 = vmatprep.subr.bf16.mxu0 0
    %1086 = vmatpush1.bf16.msra.mxu0 0
    %1087 = vmatprep.subr.bf16.mxu0 0
    %1088 = vmatpush1.bf16.msra.mxu0 0
    %1089 = vmatprep.subr.bf16.mxu0 0
    %1090 = vmatpush1.bf16.msra.mxu0 0
    %1091 = vmatprep.subr.bf16.mxu0 0
    %1092 = vmatpush1.bf16.msra.mxu0 0
    %1093 = vmatprep.subr.bf16.mxu0 0
    %1094 = vmatpush1.bf16.msra.mxu0 0
    %1095 = vmatprep.subr.bf16.mxu0 0
    %1096 = vmatpush1.bf16.msra.mxu0 0
    %1097 = vmatprep.subr.bf16.mxu0 0
    %1098 = vmatpush1.bf16.msra.mxu0 0
    %1099 = vmatprep.subr.bf16.mxu0 0
    %1100 = vmatpush1.bf16.msra.mxu0 0
    %1101 = vmatprep.mubr.bf16.mxu0 0
    %1102 = vmatmul.mubr.bf16.gmra.mrb[0].mxu0 %v997
    %v1103 = vpop.f32.mrb[0].mxu0
    %v1104 = vadd.f32 %v1019, %v1103
    %v1105 = vpop.f32.mrb[0].mxu0
    %v1106 = vpop.f32.mrb[0].mxu0
    %v1107 = vpop.f32.mrb[0].mxu0
    %1108 = vdwg.mxu0
    %v1109 = vmax.f32 %v1104, 0.0
    %v1110 = vpack.c.bf16 %v1109, %v1109
    %1111 = vst [vmem:[#allocation3] sm:$0xf] %v1110
    %v1112 = vld [vmem:[#allocation3] sm:$0xf]
    %v1113 = vld [vmem:[#allocation11] sm:$0xf]
    %v1114 = vld [vmem:[#allocation11 + $0x4] sm:$0xf]
    %v1115 = vld [vmem:[#allocation11 + $0x8] sm:$0xf]
    %v1116 = vld [vmem:[#allocation11 + $0xc] sm:$0xf]
    %v1117 = vld [vmem:[#allocation11 + $0x10] sm:$0xf]
    %v1118 = vld [vmem:[#allocation11 + $0x14] sm:$0xf]
    %v1119 = vld [vmem:[#allocation11 + $0x18] sm:$0xf]
    %v1120 = vld [vmem:[#allocation11 + $0x1c] sm:$0xf]
    %v1121 = vld [vmem:[#allocation11 + $0x20] sm:$0xf]
    %v1122 = vld [vmem:[#allocation11 + $0x24] sm:$0xf]
    %v1123 = vld [vmem:[#allocation11 + $0x28] sm:$0xf]
    %v1124 = vld [vmem:[#allocation11 + $0x2c] sm:$0xf]
    %v1125 = vld [vmem:[#allocation11 + $0x30] sm:$0xf]
    %v1126 = vld [vmem:[#allocation11 + $0x34] sm:$0xf]
    %v1127 = vld [vmem:[#allocation11 + $0x38] sm:$0xf]
    %v1128 = vld [vmem:[#allocation11 + $0x3c] sm:$0xf]
    %v1129 = vld [vmem:[%s10] sm:$0x1]
    %v1131 = vlaneseq
    %v1132 = vshrl.u32 %v1131, 7
    %v1133 = vsub.s32 0, %v1132
    %v1134 = vrot.slane %v1129, %v1133
    %v1152 = vunpack.c.l.b16 %v1113
    %v1153 = vunpack.c.l.b16 %v1114
    %v1154 = vunpack.c.l.b16 %v1115
    %v1155 = vunpack.c.l.b16 %v1116
    %v1156 = vunpack.c.l.b16 %v1117
    %v1157 = vunpack.c.l.b16 %v1118
    %v1158 = vunpack.c.l.b16 %v1119
    %v1159 = vunpack.c.l.b16 %v1120
    %v1160 = vunpack.c.l.b16 %v1121
    %v1161 = vunpack.c.l.b16 %v1122
    %v1162 = vunpack.c.l.b16 %v1123
    %v1163 = vunpack.c.l.b16 %v1124
    %v1164 = vunpack.c.l.b16 %v1125
    %v1165 = vunpack.c.l.b16 %v1126
    %v1166 = vunpack.c.l.b16 %v1127
    %v1167 = vunpack.c.l.b16 %v1128
    %v1168 = vpack.c.b16 %v1153, %v1152
    %v1169 = vpack.c.b16 %v1155, %v1154
    %v1170 = vpack.c.b16 %v1157, %v1156
    %v1171 = vpack.c.b16 %v1159, %v1158
    %v1172 = vpack.c.b16 %v1161, %v1160
    %v1173 = vpack.c.b16 %v1163, %v1162
    %v1174 = vpack.c.b16 %v1165, %v1164
    %v1175 = vpack.c.b16 %v1167, %v1166
    %1184 = vmatprep.subr.bf16.mxu0 0
    %1185 = vmatpush1.bf16.msra.mxu0 %v1168
    %1186 = vmatprep.subr.bf16.mxu0 0
    %1187 = vmatpush1.bf16.msra.mxu0 %v1169
    %1188 = vmatprep.subr.bf16.mxu0 0
    %1189 = vmatpush1.bf16.msra.mxu0 %v1170
    %1190 = vmatprep.subr.bf16.mxu0 0
    %1191 = vmatpush1.bf16.msra.mxu0 %v1171
    %1192 = vmatprep.subr.bf16.mxu0 0
    %1193 = vmatpush1.bf16.msra.mxu0 %v1172
    %1194 = vmatprep.subr.bf16.mxu0 0
    %1195 = vmatpush1.bf16.msra.mxu0 %v1173
    %1196 = vmatprep.subr.bf16.mxu0 0
    %1197 = vmatpush1.bf16.msra.mxu0 %v1174
    %1198 = vmatprep.subr.bf16.mxu0 0
    %1199 = vmatpush1.bf16.msra.mxu0 %v1175
    %1200 = vmatprep.subr.bf16.mxu0 0
    %1201 = vmatpush1.bf16.msra.mxu0 0
    %1202 = vmatprep.subr.bf16.mxu0 0
    %1203 = vmatpush1.bf16.msra.mxu0 0
    %1204 = vmatprep.subr.bf16.mxu0 0
    %1205 = vmatpush1.bf16.msra.mxu0 0
    %1206 = vmatprep.subr.bf16.mxu0 0
    %1207 = vmatpush1.bf16.msra.mxu0 0
    %1208 = vmatprep.subr.bf16.mxu0 0
    %1209 = vmatpush1.bf16.msra.mxu0 0
    %1210 = vmatprep.subr.bf16.mxu0 0
    %1211 = vmatpush1.bf16.msra.mxu0 0
    %1212 = vmatprep.subr.bf16.mxu0 0
    %1213 = vmatpush1.bf16.msra.mxu0 0
    %1214 = vmatprep.subr.bf16.mxu0 0
    %1215 = vmatpush1.bf16.msra.mxu0 0
    %1216 = vmatprep.mubr.bf16.mxu0 0
    %1217 = vmatmul.mubr.bf16.gmra.mrb[0].mxu0 %v1112
    %v1218 = vpop.f32.mrb[0].mxu0
    %v1219 = vadd.f32 %v1134, %v1218
    %v1220 = vpop.f32.mrb[0].mxu0
    %v1221 = vpop.f32.mrb[0].mxu0
    %v1222 = vpop.f32.mrb[0].mxu0
    %1223 = vdwg.mxu0
    %v1224 = vmax.f32 %v1219, 0.0
    %v1225 = vpack.c.bf16 %v1224, %v1224
    %1226 = vst [vmem:[#allocation2] sm:$0xf] %v1225
    %v1227 = vld [vmem:[#allocation2] sm:$0xf]
    %v1228 = vld [vmem:[#allocation12] sm:$0xf]
    %v1229 = vld [vmem:[#allocation12 + $0x4] sm:$0xf]
    %v1230 = vld [vmem:[#allocation12 + $0x8] sm:$0xf]
    %v1231 = vld [vmem:[#allocation12 + $0xc] sm:$0xf]
    %v1232 = vld [vmem:[#allocation12 + $0x10] sm:$0xf]
    %v1233 = vld [vmem:[#allocation12 + $0x14] sm:$0xf]
    %v1234 = vld [vmem:[#allocation12 + $0x18] sm:$0xf]
    %v1235 = vld [vmem:[#allocation12 + $0x1c] sm:$0xf]
    %v1236 = vld [vmem:[#allocation12 + $0x20] sm:$0xf]
    %v1237 = vld [vmem:[#allocation12 + $0x24] sm:$0xf]
    %v1238 = vld [vmem:[#allocation12 + $0x28] sm:$0xf]
    %v1239 = vld [vmem:[#allocation12 + $0x2c] sm:$0xf]
    %v1240 = vld [vmem:[#allocation12 + $0x30] sm:$0xf]
    %v1241 = vld [vmem:[#allocation12 + $0x34] sm:$0xf]
    %v1242 = vld [vmem:[#allocation12 + $0x38] sm:$0xf]
    %v1243 = vld [vmem:[#allocation12 + $0x3c] sm:$0xf]
    %v1244 = vld [vmem:[%s12] sm:$0x1]
    %v1246 = vlaneseq
    %v1247 = vshrl.u32 %v1246, 7
    %v1248 = vsub.s32 0, %v1247
    %v1249 = vrot.slane %v1244, %v1248
    %v1267 = vunpack.c.l.b16 %v1228
    %v1268 = vunpack.c.l.b16 %v1229
    %v1269 = vunpack.c.l.b16 %v1230
    %v1270 = vunpack.c.l.b16 %v1231
    %v1271 = vunpack.c.l.b16 %v1232
    %v1272 = vunpack.c.l.b16 %v1233
    %v1273 = vunpack.c.l.b16 %v1234
    %v1274 = vunpack.c.l.b16 %v1235
    %v1275 = vunpack.c.l.b16 %v1236
    %v1276 = vunpack.c.l.b16 %v1237
    %v1277 = vunpack.c.l.b16 %v1238
    %v1278 = vunpack.c.l.b16 %v1239
    %v1279 = vunpack.c.l.b16 %v1240
    %v1280 = vunpack.c.l.b16 %v1241
    %v1281 = vunpack.c.l.b16 %v1242
    %v1282 = vunpack.c.l.b16 %v1243
    %v1283 = vpack.c.b16 %v1268, %v1267
    %v1284 = vpack.c.b16 %v1270, %v1269
    %v1285 = vpack.c.b16 %v1272, %v1271
    %v1286 = vpack.c.b16 %v1274, %v1273
    %v1287 = vpack.c.b16 %v1276, %v1275
    %v1288 = vpack.c.b16 %v1278, %v1277
    %v1289 = vpack.c.b16 %v1280, %v1279
    %v1290 = vpack.c.b16 %v1282, %v1281
    %1299 = vmatprep.subr.bf16.mxu0 0
    %1300 = vmatpush1.bf16.msra.mxu0 %v1283
    %1301 = vmatprep.subr.bf16.mxu0 0
    %1302 = vmatpush1.bf16.msra.mxu0 %v1284
    %1303 = vmatprep.subr.bf16.mxu0 0
    %1304 = vmatpush1.bf16.msra.mxu0 %v1285
    %1305 = vmatprep.subr.bf16.mxu0 0
    %1306 = vmatpush1.bf16.msra.mxu0 %v1286
    %1307 = vmatprep.subr.bf16.mxu0 0
    %1308 = vmatpush1.bf16.msra.mxu0 %v1287
    %1309 = vmatprep.subr.bf16.mxu0 0
    %1310 = vmatpush1.bf16.msra.mxu0 %v1288
    %1311 = vmatprep.subr.bf16.mxu0 0
    %1312 = vmatpush1.bf16.msra.mxu0 %v1289
    %1313 = vmatprep.subr.bf16.mxu0 0
    %1314 = vmatpush1.bf16.msra.mxu0 %v1290
    %1315 = vmatprep.subr.bf16.mxu0 0
    %1316 = vmatpush1.bf16.msra.mxu0 0
    %1317 = vmatprep.subr.bf16.mxu0 0
    %1318 = vmatpush1.bf16.msra.mxu0 0
    %1319 = vmatprep.subr.bf16.mxu0 0
    %1320 = vmatpush1.bf16.msra.mxu0 0
    %1321 = vmatprep.subr.bf16.mxu0 0
    %1322 = vmatpush1.bf16.msra.mxu0 0
    %1323 = vmatprep.subr.bf16.mxu0 0
    %1324 = vmatpush1.bf16.msra.mxu0 0
    %1325 = vmatprep.subr.bf16.mxu0 0
    %1326 = vmatpush1.bf16.msra.mxu0 0
    %1327 = vmatprep.subr.bf16.mxu0 0
    %1328 = vmatpush1.bf16.msra.mxu0 0
    %1329 = vmatprep.subr.bf16.mxu0 0
    %1330 = vmatpush1.bf16.msra.mxu0 0
    %1331 = vmatprep.mubr.bf16.mxu0 0
    %1332 = vmatmul.mubr.bf16.gmra.mrb[0].mxu0 %v1227
    %v1333 = vpop.f32.mrb[0].mxu0
    %v1334 = vadd.f32 %v1249, %v1333
    %v1335 = vpop.f32.mrb[0].mxu0
    %v1336 = vpop.f32.mrb[0].mxu0
    %v1337 = vpop.f32.mrb[0].mxu0
    %1338 = vdwg.mxu0
    %v1339 = vpack.c.bf16 %v1334, %v1334
    %1340 = vst [vmem:[%s13] sm:$0xf] %v1339
    // Predicated region
    $region78: #{crop_model_forward.1} parent=1 // pred_check
      _
    $region79: #{crop_model_forward.1} parent=1 // pred_check_branch
      %1342 = sbr.rel (0) target = $region81
    $region80: #{crop_model_forward.1} parent=1 // pred_region
      _
    $region81: #{crop_model_forward.1} parent=1 // pred_fallthru
      _
    // Predicated region
    $region82: #{crop_model_forward.1} parent=1 // pred_check
      _
    $region83: #{crop_model_forward.1} parent=1 // pred_check_branch
      %1344 = sbr.rel (0) target = $region85
    $region84: #{crop_model_forward.1} parent=1 // pred_region
      _
    $region85: #{crop_model_forward.1} parent=1 // pred_fallthru
      _
    %1345 = vsyncpa [#allocation5], 1
    %1346 = vsyncpa [#allocation7], 1
    %1347 = vsyncpa [#allocation10], 1
    %1348 = vsyncpa [#allocation13], 1

</llo_original>
